<compile_context>
chip_gen: v6e
topology: v6e:2x2x1
jax: 0.10.0
libtpu: 0.0.40
codegen_flags: <defaults>
</compile_context>

<pallas_src>
import jax
import jax.numpy as jnp
from jax.experimental import pallas as pl
from jax.experimental.pallas import tpu as pltpu


_LANES = 128
# Per-VMEM-buffer byte budget. With double-buffered in + out (4 buffers) this
# stays at ~8 MiB total: safely under v5e's 16 MiB scoped default, v6e's
# 32 MiB default and v7x's 64 MiB physical VMEM, so no vmem_limit override is
# needed on any generation.
_PER_BUFFER_BYTES = 2 * 1024 * 1024


def _identity_kernel(x_ref, o_ref):
    # Hot path: whole-tile VMEM load + store (identity forward).
    o_ref[...] = x_ref[...]


def _sublane_multiple(dtype) -> int:
    # Sub-32-bit dtypes pack along sublanes: min row multiple is
    # 8 (f32) / 16 (bf16) / 32 (int8).
    itemsize = jnp.dtype(dtype).itemsize
    return max(8, 32 // itemsize)


def _round_up(x, m):
    return ((x + m - 1) // m) * m


@jax.jit
def _identity_forward(X):
    """Lane-dense, tiled identity copy through a Pallas TPU kernel."""
    dtype = X.dtype
    itemsize = jnp.dtype(dtype).itemsize
    sub = _sublane_multiple(dtype)

    orig_shape = X.shape
    total = X.size

    # Present a lane-dense (rows, 128) slab so stores are full-width vector
    # stores even when the module's trailing dim is narrow (e.g. D=32).
    rows = pl.cdiv(total, _LANES)

    # Largest sublane-aligned row tile whose per-buffer footprint fits budget.
    tr_max = max(sub, (_PER_BUFFER_BYTES // (_LANES * itemsize)) // sub * sub)
    tr = min(tr_max, _round_up(rows, sub))
    # Prefer >= 2 grid steps when there is enough data: lets v7x shard the
    # "parallel" axis across its 2 TensorCores for this mem-bound copy.
    if rows > sub and rows <= tr:
        tr = _round_up(pl.cdiv(rows, 2), sub)

    padded_rows = _round_up(rows, tr)
    padded_total = padded_rows * _LANES

    flat = X.reshape(-1)
    if padded_total != total:
        flat = jnp.pad(flat, (0, padded_total - total))
    slab = flat.reshape(padded_rows, _LANES)

    grid = (padded_rows // tr,)

    out = pl.pallas_call(
        _identity_kernel,
        out_shape=jax.ShapeDtypeStruct((padded_rows, _LANES), dtype),
        grid_spec=pltpu.PrefetchScalarGridSpec(
            num_scalar_prefetch=0,
            grid=grid,
            in_specs=[pl.BlockSpec((tr, _LANES), lambda i: (i, 0))],
            out_specs=pl.BlockSpec((tr, _LANES), lambda i: (i, 0)),
        ),
        compiler_params=pltpu.CompilerParams(
            dimension_semantics=("parallel",),
        ),
        # Identity copy: let XLA alias the output with the internal slab and
        # drop/shrink the extra HBM traffic where possible.
        input_output_aliases={0: 0},
        # Pure memory op hint for XLA's scheduler (zero flops).
        cost_estimate=pl.CostEstimate(
            flops=0,
            transcendentals=0,
            bytes_accessed=2 * padded_total * itemsize,
        ),
    )(slab)

    return out.reshape(-1)[:total].reshape(orig_shape)


class Layer:
    """JAX/Pallas mirror of the PyTorch VIP base `Layer`."""

    def __init__(self, input_dim=None, dtype=jnp.float32, device=None):
        self.dtype = dtype
        self.device = device
        self.input_dim = input_dim
        self.freeze = False

    # TODO(synk): Layer.KL is abstract (raises NotImplementedError) in the
    #             reference module; no KL term is computed here.
    def KL(self):
        raise NotImplementedError

    # TODO(synk): Layer.forward is abstract in the reference module; the
    #             identity pass-through below is the only defined behavior and
    #             exercises the Pallas copy kernel end-to-end.
    def forward(self, X):
        X = jnp.asarray(X, dtype=self.dtype)
        return _identity_forward(X)

    def __call__(self, X):
        return self.forward(X)


if __name__ == "__main__":
    key = jax.random.PRNGKey(0)
    batch, input_dim = 8, 32
    x = jax.random.normal(key, (batch, input_dim), dtype=jnp.float32)

    layer = Layer(input_dim=input_dim, dtype=jnp.float32)
    y = layer(x)
    jax.block_until_ready(y)

    assert y.shape == x.shape and y.dtype == x.dtype
    assert bool(jnp.allclose(y, x))
    print("KERNEL_OK")
</pallas_src>

<mosaic_0001>
module attributes {stable_mosaic.version = 11 : i64} {
  func.func @_identity_kernel(%arg0: i32, %arg1: memref<8x128xf32, #tpu.memory_space<vmem>>, %arg2: memref<8x128xf32, #tpu.memory_space<vmem>>) attributes {dimension_semantics = [#tpu.dimension_semantics<parallel>], iteration_bounds = array<i64: 1>, scalar_prefetch = 0 : i64, scratch_operands = 0 : i64, tpu.core_type = #tpu.core_type<tc>, window_params = [{transform_indices = @transform_0, window_bounds = array<i64: 8, 128>}, {transform_indices = @transform_1, window_bounds = array<i64: 8, 128>}]} {
    %c0 = arith.constant 0 : index
    %c0_0 = arith.constant 0 : index
    %0 = vector.load %arg1[%c0, %c0_0] : memref<8x128xf32, #tpu.memory_space<vmem>>, vector<8x128xf32>
    %c0_1 = arith.constant 0 : index
    %c0_2 = arith.constant 0 : index
    %1 = vector.load %arg2[%c0_1, %c0_2] : memref<8x128xf32, #tpu.memory_space<vmem>>, vector<8x128xf32>
    tpu.vector_store %arg2[%c0_1, %c0_2], %0 {strides = array<i32>} : memref<8x128xf32, #tpu.memory_space<vmem>>, vector<8x128xf32>,
    return
  }
  func.func @transform_0(%arg0: i32) -> (i32, i32) {
    %c0_i32 = arith.constant 0 : i32
    %c0_i32_0 = arith.constant 0 : i32
    return %arg0, %c0_i32 : i32, i32
  }
  func.func @transform_1(%arg0: i32) -> (i32, i32) {
    %c0_i32 = arith.constant 0 : i32
    %c0_i32_0 = arith.constant 0 : i32
    return %arg0, %c0_i32 : i32, i32
  }
}

</mosaic_0001>

<llo_original>
// kernel: _identity_forward.1
$region0: #{_identity_forward.1}
  #allocation0 [shape = 'u32[]', space=smem, size = 0x4, offset = 0x4, fixed_abs, tag = 'smem constant byte address 0x4 - core index']
  #allocation1 [shape = 'u32[144,128]{1,0:T(1,128)}', space=vmem, size = 0x12000, scoped, tag = 'internal scratch']
  %s0 = inlined_call_operand.vmem [shape: f32[8,128], index: 0, kind: input, shape index: {}, may-alias: {0,1}]
  %s1 = inlined_call_operand.vmem [shape: f32[8,128], index: 1, kind: output, shape index: {}, may-alias: {0,1}]
  %s2 = sld [smem:[#allocation0]]
  $region14: #{_identity_forward.1} parent=0
    _
  %s4 = ssub.s32 1, %s2
  %s5 = scalar_select 0, %s4, %s2
  // Predicated region
  $region2: #{_identity_forward.1} parent=0 // pred_check
    _
  $region3: #{_identity_forward.1} parent=0 // pred_check_branch
    %7 = sbr.rel (0) target = $region5
  $region4: #{_identity_forward.1} parent=0 // pred_region
    _
  $region5: #{_identity_forward.1} parent=0 // pred_fallthru
    _
  %v8 = vld [vmem:[%s0] sm:$0xff]
  %9 = vst [vmem:[%s1] sm:$0xff] %v8
  // Predicated region
  $region6: #{_identity_forward.1} parent=0 // pred_check
    _
  $region7: #{_identity_forward.1} parent=0 // pred_check_branch
    %11 = sbr.rel (0) target = $region9
  $region8: #{_identity_forward.1} parent=0 // pred_region
    _
  $region9: #{_identity_forward.1} parent=0 // pred_fallthru
    _
  // Predicated region
  $region10: #{_identity_forward.1} parent=0 // pred_check
    _
  $region11: #{_identity_forward.1} parent=0 // pred_check_branch
    %13 = sbr.rel (0) target = $region13
  $region12: #{_identity_forward.1} parent=0 // pred_region
    _
  $region13: #{_identity_forward.1} parent=0 // pred_fallthru
    _

</llo_original>
